<compile_context>
chip_gen: v7x
topology: tpu7x:2x2x1
jax: 0.10.0
libtpu: 0.0.40
codegen_flags: <defaults>
</compile_context>

<pallas_src>
import functools

import jax
import jax.numpy as jnp
from jax.experimental import pallas as pl
from jax.experimental.pallas import tpu as pltpu


_KH = 4
_KW = 4
_PAD = 1
_TARGET_M = 1024          # target matmul rows (tile_ho * wo_pad) per grid step
_IM2COL_MAX_CIN = 8       # tap-pack tiny-cin (input_nc) layers in XLA glue


def _round_up(x, m):
    return ((x + m - 1) // m) * m


@functools.lru_cache(maxsize=1)
def _vmem_limit_bytes():
    # 128 MiB physical on v5e/v6e, 64 MiB per TensorCore on v7x.  Use ~70% of
    # capacity (leaves room for Mosaic scratch + double-buffered outputs).
    try:
        cap = int(pltpu.get_tpu_info().vmem_capacity_bytes)
    except Exception:
        cap = 64 * 1024 * 1024
    return max(32 * 1024 * 1024, min(int(cap * 0.70), 96 * 1024 * 1024))


def _conv_kernel(*refs, taps, tile_ho, wo_pad, neg_slope, single_out):
    """One (batch, row-tile) grid step of a 4x4 conv + folded affine + LeakyReLU.

    refs = (phase_0, ..., phase_{P-1}, w, scale, shift, out).
    `taps` is a static tuple of (phase_index, row_offset, col_offset).  For the
    matmul path the K axis of `w` is ordered (tap, cin) to match the in-kernel
    lane-axis concatenation of the tap windows, so each grid step issues one
    MXU dot with K = len(taps) * cin instead of 16 dots with K = cin.
    """
    *phase_refs, w_ref, scale_ref, shift_ref, o_ref = refs
    row0 = pl.program_id(1) * tile_ho

    if not single_out:
        windows = []
        for (ph_idx, a, b) in taps:
            ph = phase_refs[ph_idx]
            cin = ph.shape[-1]
            x = ph[0, pl.ds(row0 + a, tile_ho), pl.ds(b, wo_pad), :]
            windows.append(x.reshape(tile_ho * wo_pad, cin))     # bf16 (M, cin)
        x_cat = windows[0] if len(windows) == 1 else jnp.concatenate(
            windows, axis=-1)                                    # (M, 16*cin)
        y = jnp.dot(x_cat, w_ref[...], preferred_element_type=jnp.float32)
        y = y * scale_ref[...] + shift_ref[...]
        if neg_slope is not None:
            y = jnp.where(y >= 0.0, y, neg_slope * y)
        o_ref[...] = y.reshape(o_ref.shape).astype(o_ref.dtype)
    else:
        # Cout == 1 (final layer): lane-dense path (lanes = output width) —
        # VPU multiply + XLU lane reduction instead of an (M, 1) matmul with
        # masked partial stores.
        # TODO(synk): on v6e/v7x the multiply could stay in bf16; kept f32 so
        # the same kernel is also correct/fast enough on v5e (no bf16 VPU).
        acc = jnp.zeros((tile_ho, wo_pad), jnp.float32)
        for t, (ph_idx, a, b) in enumerate(taps):
            ph = phase_refs[ph_idx]
            x = ph[0, pl.ds(row0 + a, tile_ho), pl.ds(b, wo_pad), :]
            wk = w_ref[t]                                        # (1, cin)
            acc = acc + jnp.sum(x.astype(jnp.float32) * wk.astype(jnp.float32),
                                axis=-1)
        y = acc * scale_ref[...] + shift_ref[...]                # (1,1) bcast
        if neg_slope is not None:
            y = jnp.where(y >= 0.0, y, neg_slope * y)
        o_ref[...] = y.reshape(o_ref.shape).astype(o_ref.dtype)


def conv_layer_pallas(x_nhwc, layer):
    """4x4 conv (stride 1 or 2, pad 1) + folded affine + optional LeakyReLU."""
    stride = layer["stride"]
    cin, cout = layer["cin"], layer["cout"]
    neg_slope = layer["neg_slope"]
    w_packed, scale, shift = layer["w_packed"], layer["scale"], layer["shift"]
    single_out = (cout == 1)
    use_im2col = layer["im2col"]

    x_nhwc = x_nhwc.astype(jnp.bfloat16)      # bf16 inputs + bf16 glue everywhere
    n, h, w, _ = x_nhwc.shape
    ho = (h + 2 * _PAD - _KH) // stride + 1
    wo = (w + 2 * _PAD - _KW) // stride + 1
    assert ho > 0 and wo > 0, (ho, wo)

    wo_pad = _round_up(wo, 16)
    tile_ho = min(ho, max(1, _TARGET_M // wo_pad))
    if tile_ho < ho:                          # keep row tiles 8-aligned
        tile_ho = max(8, (tile_ho // 8) * 8)
    n_tiles = -(-ho // tile_ho)
    if n * n_tiles < 2 and ho >= 16:          # keep both v7x TensorCores busy
        tile_ho = max(8, ((ho // 2) // 8) * 8)
        n_tiles = -(-ho // tile_ho)
    ho_pad = n_tiles * tile_ho

    if use_im2col:
        # Tiny-cin first layer: tap-pack in XLA glue (im2col).  cin is only
        # input_nc (3-4), so the packed activation is small, lane-dense, and
        # the kernel degenerates to a single K = kh*kw*cin matmul.
        xp = jnp.pad(x_nhwc, ((0, 0), (_PAD, _PAD), (_PAD, _PAD), (0, 0)))
        cols = [xp[:, i:i + stride * (ho - 1) + 1:stride,
                   j:j + stride * (wo - 1) + 1:stride, :]
                for i in range(_KH) for j in range(_KW)]
        xcol = jnp.concatenate(cols, axis=-1)            # (n, ho, wo, 16*cin)
        xcol = jnp.pad(xcol, ((0, 0), (0, ho_pad - ho), (0, wo_pad - wo), (0, 0)))
        phases = [xcol]
        taps = ((0, 0, 0),)
        in_specs = [pl.BlockSpec((1, ho_pad, wo_pad, _KH * _KW * cin),
                                 lambda nb, t: (nb, 0, 0, 0))]
    else:
        # Stride-phase views of the zero-padded input (plain-JAX glue, all bf16):
        # conv tap (i, j) becomes a contiguous window of phase (i % s, j % s),
        # so patch extraction happens on VMEM-resident data (no im2col in HBM).
        req_h = [ho_pad + (_KH - 1 - p) // stride for p in range(stride)]
        req_w = [wo_pad + (_KW - 1 - q) // stride for q in range(stride)]
        need_h = max(p + stride * (req_h[p] - 1) + 1 for p in range(stride))
        need_w = max(q + stride * (req_w[q] - 1) + 1 for q in range(stride))
        xp = jnp.pad(x_nhwc, ((0, 0),
                              (_PAD, max(0, need_h - h - _PAD)),
                              (_PAD, max(0, need_w - w - _PAD)),
                              (0, 0)))
        phases, in_specs = [], []
        for p in range(stride):
            for q in range(stride):
                ph = xp[:, p::stride, q::stride, :][:, :req_h[p], :req_w[q], :]
                phases.append(ph)
                in_specs.append(pl.BlockSpec((1, req_h[p], req_w[q], cin),
                                             lambda nb, t: (nb, 0, 0, 0)))
        taps = tuple(((i % stride) * stride + (j % stride), i // stride, j // stride)
                     for i in range(_KH) for j in range(_KW))

    w_idx = (0,) * w_packed.ndim
    in_specs += [
        pl.BlockSpec(w_packed.shape, lambda nb, t: w_idx),
        pl.BlockSpec(scale.shape, lambda nb, t: (0, 0)),
        pl.BlockSpec(shift.shape, lambda nb, t: (0, 0)),
    ]

    if single_out:
        # Final layer output stays f32 (it is the network output).
        out_shape = jax.ShapeDtypeStruct((n, ho_pad, wo_pad), jnp.float32)
        out_spec = pl.BlockSpec((1, tile_ho, wo_pad), lambda nb, t: (nb, t, 0))
        out_bytes = n * ho_pad * wo_pad * 4
    else:
        # Intermediate layers write back bf16 (next layer consumes bf16 anyway;
        # matches the reference's per-layer quantization) -> half the HBM
        # writeback + half the inter-layer glue bytes.
        out_shape = jax.ShapeDtypeStruct((n, ho_pad * wo_pad, cout), jnp.bfloat16)
        out_spec = pl.BlockSpec((1, tile_ho * wo_pad, cout),
                                lambda nb, t: (nb, t, 0))
        out_bytes = n * ho_pad * wo_pad * cout * 2

    flops = 2 * n * ho_pad * wo_pad * _KH * _KW * cin * cout
    bytes_accessed = (sum(int(a.size) for a in phases) * 2
                      + int(w_packed.size) * 2 + out_bytes)

    kernel = functools.partial(
        _conv_kernel, taps=taps, tile_ho=tile_ho, wo_pad=wo_pad,
        neg_slope=neg_slope, single_out=single_out)

    out = pl.pallas_call(
        kernel,
        out_shape=out_shape,
        grid=(n, n_tiles),
        in_specs=in_specs,
        out_specs=out_spec,
        compiler_params=pltpu.CompilerParams(
            dimension_semantics=("parallel", "parallel"),
            vmem_limit_bytes=_vmem_limit_bytes()),
        cost_estimate=pl.CostEstimate(flops=flops, transcendentals=0,
                                      bytes_accessed=bytes_accessed),
    )(*phases, w_packed, scale, shift)

    if single_out:
        return out[:, :ho, :wo, None]
    # TODO(synk): for very large feature maps, band the phases over rows with a
    # (KH-1)-row halo and single-buffer them (pl.Buffered(1)) to bound VMEM, and
    # fuse the crop/pad glue by writing directly into the next layer's layout.
    return out.reshape(n, ho_pad, wo_pad, cout)[:, :ho, :wo, :]


def init_params(key, input_nc, ndf, n_layers):
    """Deterministic parameter init mirroring NLayerDiscriminator.__init__."""
    cfg = [(input_nc, ndf, 2, False, True)]          # (cin, cout, stride, norm, act)
    nf_mult = 1
    for n in range(1, n_layers):
        nf_prev, nf_mult = nf_mult, min(2 ** n, 8)
        cfg.append((ndf * nf_prev, ndf * nf_mult, 2, True, True))
    nf_prev, nf_mult = nf_mult, min(2 ** n_layers, 8)
    cfg.append((ndf * nf_prev, ndf * nf_mult, 1, True, True))
    cfg.append((ndf * nf_mult, 1, 1, False, False))   # last_activation='none'

    params = []
    for (cin, cout, stride, use_norm, use_act) in cfg:
        key, k1, k2, k3, k4 = jax.random.split(key, 5)
        w = jax.random.normal(k1, (cout, cin, _KH, _KW), jnp.float32) * 0.05
        b = jax.random.normal(k2, (cout,), jnp.float32) * 0.05
        if use_norm:
            # TODO(synk): BatchNorm is eval-mode only (running stats mean=0,
            # var=1 folded into a per-channel affine); training-mode batch
            # statistics are not reproduced.
            gamma = 1.0 + 0.1 * jax.random.normal(k3, (cout,), jnp.float32)
            beta = 0.1 * jax.random.normal(k4, (cout,), jnp.float32)
            eps = 1e-5
            scale = gamma / jnp.sqrt(jnp.ones((cout,), jnp.float32) + eps)
            shift = beta + b * scale
        else:
            scale = jnp.ones((cout,), jnp.float32)
            shift = b

        # Hoisted kernel-format weights.  K axis ordered (kh, kw, cin) to match
        # both the kernel's tap-window concatenation and the XLA-side im2col
        # packing of the first layer.
        w_hwio = jnp.transpose(w, (2, 3, 1, 0))             # (kh, kw, cin, cout)
        if cout == 1:
            # Final layer: (kh*kw, 1, cin) for the lane-dense VPU path.
            w_packed = jnp.transpose(w_hwio.reshape(_KH * _KW, cin, 1), (0, 2, 1))
        else:
            w_packed = w_hwio.reshape(_KH * _KW * cin, cout)
        params.append(dict(
            cin=cin, cout=cout, stride=stride,
            im2col=(cout != 1 and cin <= _IM2COL_MAX_CIN),
            neg_slope=0.2 if use_act else None,
            w_packed=w_packed.astype(jnp.bfloat16),
            w_hwio=w_hwio.astype(jnp.bfloat16),             # for the reference
            scale=scale.reshape(1, cout),
            shift=shift.reshape(1, cout),
        ))
    return params


def discriminator_forward(x_nchw, params):
    x = jnp.transpose(x_nchw, (0, 2, 3, 1))          # NCHW -> NHWC
    for layer in params:
        x = conv_layer_pallas(x, layer)
    return jnp.transpose(x, (0, 3, 1, 2))            # NHWC -> NCHW


def reference_forward(x_nchw, params):
    """Pure-JAX reference (lax.conv) with the same per-layer bf16 rounding."""
    x = jnp.transpose(x_nchw, (0, 2, 3, 1))
    for layer in params:
        xq = x.astype(jnp.bfloat16).astype(jnp.float32)
        wq = layer["w_hwio"].astype(jnp.float32)
        y = jax.lax.conv_general_dilated(
            xq, wq, (layer["stride"], layer["stride"]),
            [(_PAD, _PAD), (_PAD, _PAD)],
            dimension_numbers=("NHWC", "HWIO", "NHWC"))
        y = y * layer["scale"] + layer["shift"]
        if layer["neg_slope"] is not None:
            y = jnp.where(y >= 0.0, y, layer["neg_slope"] * y)
        x = y
    return jnp.transpose(x, (0, 3, 1, 2))


if __name__ == "__main__":
    key = jax.random.PRNGKey(0)
    kx, kp = jax.random.split(key)

    N, C, H, W = 2, 4, 32, 32                        # small test shapes
    ndf, n_layers = 16, 3
    x = jax.random.normal(kx, (N, C, H, W), jnp.float32)
    params = init_params(kp, input_nc=C, ndf=ndf, n_layers=n_layers)

    out = jax.block_until_ready(discriminator_forward(x, params))
    ref = jax.block_until_ready(reference_forward(x, params))

    assert out.shape == (N, 1, 2, 2), out.shape      # PatchGAN map for 32x32 input
    max_err = float(jnp.max(jnp.abs(out - ref)))
    assert jnp.allclose(out, ref, rtol=2e-2, atol=2e-2), max_err

    print("KERNEL_OK")
</pallas_src>

<mosaic_0001>
module attributes {stable_mosaic.version = 11 : i64} {
  func.func @_conv_kernel(%arg0: i32, %arg1: i32, %arg2: memref<1x16x16x64xbf16, #tpu.memory_space<vmem>>, %arg3: memref<64x16xbf16, #tpu.memory_space<vmem>>, %arg4: memref<1x16xf32, #tpu.memory_space<vmem>>, %arg5: memref<1x16xf32, #tpu.memory_space<vmem>>, %arg6: memref<1x256x16xbf16, #tpu.memory_space<vmem>>) attributes {dimension_semantics = [#tpu.dimension_semantics<parallel>, #tpu.dimension_semantics<parallel>], iteration_bounds = array<i64: 2, 1>, scalar_prefetch = 0 : i64, scratch_operands = 0 : i64, tpu.core_type = #tpu.core_type<tc>, window_params = [{transform_indices = @transform_0, window_bounds = array<i64: 1, 16, 16, 64>}, {pipeline_mode = #tpu.pipeline_mode<synchronous>, transform_indices = @transform_1, window_bounds = array<i64: 64, 16>}, {pipeline_mode = #tpu.pipeline_mode<synchronous>, transform_indices = @transform_2, window_bounds = array<i64: 1, 16>}, {pipeline_mode = #tpu.pipeline_mode<synchronous>, transform_indices = @transform_3, window_bounds = array<i64: 1, 16>}, {transform_indices = @transform_4, window_bounds = array<i64: 1, 256, 16>}]} {
    %c16_i32 = arith.constant 16 : i32
    %0 = arith.muli %arg1, %c16_i32 : i32
    %c0_i32 = arith.constant 0 : i32
    %1 = arith.addi %0, %c0_i32 : i32
    %c0 = arith.constant 0 : index
    %2 = arith.index_cast %1 : i32 to index
    %c0_0 = arith.constant 0 : index
    %c0_1 = arith.constant 0 : index
    %3 = vector.load %arg2[%c0, %2, %c0_0, %c0_1] : memref<1x16x16x64xbf16, #tpu.memory_space<vmem>>, vector<1x16x16x64xbf16>
    %4 = vector.shape_cast %3 : vector<1x16x16x64xbf16> to vector<16x16x64xbf16>
    %5 = vector.shape_cast %4 : vector<16x16x64xbf16> to vector<256x64xbf16>
    %c0_2 = arith.constant 0 : index
    %c0_3 = arith.constant 0 : index
    %6 = vector.load %arg3[%c0_2, %c0_3] : memref<64x16xbf16, #tpu.memory_space<vmem>>, vector<64x16xbf16>
    %cst = arith.constant dense<0.000000e+00> : vector<256x16xf32>
    %7 = tpu.matmul %5, %6, %cst {dimension_numbers = #tpu.dot_dimension_numbers<[1], [0], [0], [1], [0, 0, 1, 1], [], []>} : vector<256x64xbf16>, vector<64x16xbf16>, vector<256x16xf32> -> vector<256x16xf32>
    %c0_4 = arith.constant 0 : index
    %c0_5 = arith.constant 0 : index
    %8 = vector.load %arg4[%c0_4, %c0_5] : memref<1x16xf32, #tpu.memory_space<vmem>>, vector<1x16xf32>
    %9 = vector.broadcast %8 : vector<1x16xf32> to vector<256x16xf32>
    %10 = arith.mulf %7, %9 : vector<256x16xf32>
    %c0_6 = arith.constant 0 : index
    %c0_7 = arith.constant 0 : index
    %11 = vector.load %arg5[%c0_6, %c0_7] : memref<1x16xf32, #tpu.memory_space<vmem>>, vector<1x16xf32>
    %12 = vector.broadcast %11 : vector<1x16xf32> to vector<256x16xf32>
    %13 = arith.addf %10, %12 : vector<256x16xf32>
    %cst_8 = arith.constant 0.000000e+00 : f32
    %14 = vector.broadcast %cst_8 : f32 to vector<256x16xf32>
    %15 = arith.cmpf oge, %13, %14 : vector<256x16xf32>
    %cst_9 = arith.constant 2.000000e-01 : f32
    %16 = vector.broadcast %cst_9 : f32 to vector<256x16xf32>
    %17 = arith.mulf %16, %13 : vector<256x16xf32>
    %18 = arith.select %15, %13, %17 : vector<256x16xi1>, vector<256x16xf32>
    %19 = vector.shape_cast %18 : vector<256x16xf32> to vector<1x256x16xf32>
    %20 = arith.truncf %19 : vector<1x256x16xf32> to vector<1x256x16xbf16>
    %c0_10 = arith.constant 0 : index
    %c0_11 = arith.constant 0 : index
    %c0_12 = arith.constant 0 : index
    %21 = vector.load %arg6[%c0_10, %c0_11, %c0_12] : memref<1x256x16xbf16, #tpu.memory_space<vmem>>, vector<1x256x16xbf16>
    tpu.vector_store %arg6[%c0_10, %c0_11, %c0_12], %20 {strides = array<i32>} : memref<1x256x16xbf16, #tpu.memory_space<vmem>>, vector<1x256x16xbf16>,
    return
  }
  func.func @transform_0(%arg0: i32, %arg1: i32) -> (i32, i32, i32, i32) {
    %c0_i32 = arith.constant 0 : i32
    %c0_i32_0 = arith.constant 0 : i32
    %c0_i32_1 = arith.constant 0 : i32
    %c0_i32_2 = arith.constant 0 : i32
    return %arg0, %c0_i32, %c0_i32_0, %c0_i32_1 : i32, i32, i32, i32
  }
  func.func @transform_1(%arg0: i32, %arg1: i32) -> (i32, i32) {
    %c0_i32 = arith.constant 0 : i32
    %c0_i32_0 = arith.constant 0 : i32
    %c0_i32_1 = arith.constant 0 : i32
    return %c0_i32, %c0_i32_0 : i32, i32
  }
  func.func @transform_2(%arg0: i32, %arg1: i32) -> (i32, i32) {
    %c0_i32 = arith.constant 0 : i32
    %c0_i32_0 = arith.constant 0 : i32
    %c0_i32_1 = arith.constant 0 : i32
    return %c0_i32, %c0_i32_0 : i32, i32
  }
  func.func @transform_3(%arg0: i32, %arg1: i32) -> (i32, i32) {
    %c0_i32 = arith.constant 0 : i32
    %c0_i32_0 = arith.constant 0 : i32
    %c0_i32_1 = arith.constant 0 : i32
    return %c0_i32, %c0_i32_0 : i32, i32
  }
  func.func @transform_4(%arg0: i32, %arg1: i32) -> (i32, i32, i32) {
    %c0_i32 = arith.constant 0 : i32
    %c0_i32_0 = arith.constant 0 : i32
    return %arg0, %arg1, %c0_i32 : i32, i32, i32
  }
}

</mosaic_0001>

<llo_original>
// kernel: tpu_custom_call.1
$region0: #{tpu_custom_call.1}
  #allocation0 [shape = 'u32[]', space=smem, size = 0x4, offset = 0x4, fixed_abs, tag = 'smem constant byte address 0x4 - core index']
  #allocation1 [shape = 'u32[144,128]{1,0:T(1,128)}', space=vmem, size = 0x12000, scoped, tag = 'internal scratch']
  %s0 = inlined_call_operand.hbm [shape: bf16[2,16,16,64], index: 0, kind: input, shape index: {}]
  %s1 = inlined_call_operand.vmem [shape: bf16[64,16], index: 1, kind: input, shape index: {}]
  %s2 = inlined_call_operand.vmem [shape: f32[1,16], index: 2, kind: input, shape index: {}]
  %s3 = inlined_call_operand.vmem [shape: f32[1,16], index: 3, kind: input, shape index: {}]
  %s4 = inlined_call_operand.vmem [shape: bf16[2,256,16], index: 4, kind: output, shape index: {}]
  %s5 = sld [smem:[#allocation0]]
  $region53: #{tpu_custom_call.1} parent=0
    _
  %s7 = ssub.s32 1, %s5
  %s8 = scalar_select 0, %s7, %s5
  $region1: #{tpu_custom_call.1} parent=0
    #allocation2 [shape = 'u8[131072]{0}', space=vmem, size = 0x20000, scoped, tag = 'input window, operand 0']
    #allocation3 [shape = 's32[2]{0}', space=sflag, size = 0x8, scoped, tag = 'scoped memory for tpu_custom_call.1']
    %9 = vsyncpa [#allocation3], 0
    %s10 = scalar_lea.sflag [#allocation3], 1
    %11 = vsyncpa %s10, 0
    loop: start=0, step=1, limit=4
    $region2: #{tpu_custom_call.1} parent=1 // loop_pre_header
      _
    $region3: #{tpu_custom_call.1} parent=1 // loop_header
      %s13 = sphi 0, %s17
      %p14 = scmp.ge.s32.totalorder %s13, 4
      %s20 = sphi 0, %s32
      %s21 = sphi 0, %s28
      %s22 = sphi 0, %s20
      %s23 = sphi 0, %s21
      %s24 = sphi 0, %s22
      %s25 = sphi 0, %s23
      %s35 = sphi 0, %s37
      %s38 = sphi 0, %s35
      %s39 = sphi 0, %s38
      %s55 = sphi 0, %s39
      %s59 = sphi 0, %s59
      %s61 = sphi 0, %s59
      %s62 = sphi 0, %s61
      %s76 = sphi 0, %s62
      %s80 = sphi 0, %s80
      %s82 = sphi 0, %s80
      %s83 = sphi 0, %s82
      %s97 = sphi 0, %s83
      %s101 = sphi 0, %s101
      %s103 = sphi 0, %s101
      %s104 = sphi 0, %s103
      %s118 = sphi 0, %s104
      %s126 = sphi 0, %s128
      %s129 = sphi 0, %s126
      %s130 = sphi 0, %s129
      %s146 = sphi 0, %s130
    $region4: #{tpu_custom_call.1} parent=1 // loop_header_branch
      %16 = sbr.rel (%p14) target = $region8
    $region5: #{tpu_custom_call.1} parent=1 // loop_body
      %s18 = ssub.s32 %s13, 1
      %s19 = ssub.s32 %s13, 2
      %s26 = sadd.s32 1, %s21
      %p27 = scmp.ge.s32.totalorder %s26, 1
      %s28 = scalar_select %p27, 0, %s26
      %s29 = sadd.s32 1, %s20
      %s30 = scalar_select %p27, %s29, %s20
      %p31 = scmp.ge.s32.totalorder %s30, 2
      %s32 = scalar_select %p31, 0, %s30
      %s33 = ssub.s32 %s20, %s32
      %p34 = scmp.eq.s32.totalorder %s33, 0
      %s36 = sadd.s32 %s35, 1
      %s37 = scalar_select %p34, %s35, %s36
      %p40 = pneg %p34
      %p41 = scmp.eq.s32.totalorder %s13, 1
      %p42 = por %p40, %p41
      %p43 = scmp.ne.s32.totalorder %s35, %s38
      %p44 = scmp.eq.s32.totalorder %s13, 0
      %p45 = por %p43, %p44
      %p46 = scmp.ne.s32.totalorder %s35, %s38
      %p47 = scmp.eq.s32.totalorder %s18, 1
      %p48 = por %p46, %p47
      %p49 = scmp.ne.s32.totalorder %s38, %s39
      %p50 = scmp.eq.s32.totalorder %s18, 0
      %p51 = por %p49, %p50
      %p52 = scmp.ne.s32.totalorder %s38, %s39
      %p53 = scmp.eq.s32.totalorder %s19, 1
      %p54 = por %p52, %p53
      %p56 = scmp.ne.s32.totalorder %s39, %s55
      %p57 = scmp.eq.s32.totalorder %s19, 0
      %p58 = por %p56, %p57
      %s60 = sadd.s32 %s59, 1
      %p63 = scmp.eq.s32.totalorder %s13, 1
      %p64 = scmp.ne.s32.totalorder %s59, %s61
      %p65 = scmp.eq.s32.totalorder %s13, 0
      %p66 = por %p64, %p65
      %p67 = scmp.ne.s32.totalorder %s59, %s61
      %p68 = scmp.eq.s32.totalorder %s18, 1
      %p69 = por %p67, %p68
      %p70 = scmp.ne.s32.totalorder %s61, %s62
      %p71 = scmp.eq.s32.totalorder %s18, 0
      %p72 = por %p70, %p71
      %p73 = scmp.ne.s32.totalorder %s61, %s62
      %p74 = scmp.eq.s32.totalorder %s19, 1
      %p75 = por %p73, %p74
      %p77 = scmp.ne.s32.totalorder %s62, %s76
      %p78 = scmp.eq.s32.totalorder %s19, 0
      %p79 = por %p77, %p78
      %s81 = sadd.s32 %s80, 1
      %p84 = scmp.eq.s32.totalorder %s13, 1
      %p85 = scmp.ne.s32.totalorder %s80, %s82
      %p86 = scmp.eq.s32.totalorder %s13, 0
      %p87 = por %p85, %p86
      %p88 = scmp.ne.s32.totalorder %s80, %s82
      %p89 = scmp.eq.s32.totalorder %s18, 1
      %p90 = por %p88, %p89
      %p91 = scmp.ne.s32.totalorder %s82, %s83
      %p92 = scmp.eq.s32.totalorder %s18, 0
      %p93 = por %p91, %p92
      %p94 = scmp.ne.s32.totalorder %s82, %s83
      %p95 = scmp.eq.s32.totalorder %s19, 1
      %p96 = por %p94, %p95
      %p98 = scmp.ne.s32.totalorder %s83, %s97
      %p99 = scmp.eq.s32.totalorder %s19, 0
      %p100 = por %p98, %p99
      %s102 = sadd.s32 %s101, 1
      %p105 = scmp.eq.s32.totalorder %s13, 1
      %p106 = scmp.ne.s32.totalorder %s101, %s103
      %p107 = scmp.eq.s32.totalorder %s13, 0
      %p108 = por %p106, %p107
      %p109 = scmp.ne.s32.totalorder %s101, %s103
      %p110 = scmp.eq.s32.totalorder %s18, 1
      %p111 = por %p109, %p110
      %p112 = scmp.ne.s32.totalorder %s103, %s104
      %p113 = scmp.eq.s32.totalorder %s18, 0
      %p114 = por %p112, %p113
      %p115 = scmp.ne.s32.totalorder %s103, %s104
      %p116 = scmp.eq.s32.totalorder %s19, 1
      %p117 = por %p115, %p116
      %p119 = scmp.ne.s32.totalorder %s104, %s118
      %p120 = scmp.eq.s32.totalorder %s19, 0
      %p121 = por %p119, %p120
      %s122 = ssub.s32 %s20, %s32
      %s123 = ssub.s32 %s21, %s28
      %s124 = sor.u32 %s122, %s123
      %p125 = scmp.eq.s32.totalorder %s124, 0
      %s127 = sadd.s32 %s126, 1
      %s128 = scalar_select %p125, %s126, %s127
      %p131 = pneg %p125
      %p132 = scmp.eq.s32.totalorder %s13, 1
      %p133 = por %p131, %p132
      %p134 = scmp.ne.s32.totalorder %s126, %s129
      %p135 = scmp.eq.s32.totalorder %s13, 0
      %p136 = por %p134, %p135
      %p137 = scmp.ne.s32.totalorder %s126, %s129
      %p138 = scmp.eq.s32.totalorder %s18, 1
      %p139 = por %p137, %p138
      %p140 = scmp.ne.s32.totalorder %s129, %s130
      %p141 = scmp.eq.s32.totalorder %s18, 0
      %p142 = por %p140, %p141
      %p143 = scmp.ne.s32.totalorder %s129, %s130
      %p144 = scmp.eq.s32.totalorder %s19, 1
      %p145 = por %p143, %p144
      %p147 = scmp.ne.s32.totalorder %s130, %s146
      %p148 = scmp.eq.s32.totalorder %s19, 0
      %p149 = por %p147, %p148
      %p150 = scmp.le.s32.totalorder 1, %s13
      %p151 = scmp.lt.s32.totalorder %s13, 3
      %p152 = pnand %p150, %p151
      %p153 = pneg %p152
      // Predicated region
      $region9: #{tpu_custom_call.1} parent=5 // pred_check
        _
      $region10: #{tpu_custom_call.1} parent=5 // pred_check_branch
        %155 = sbr.rel (%p152) target = $region12
      $region11: #{tpu_custom_call.1} parent=5 // pred_region
        %s156 = ssub.s32 %s13, 1
        // Predicated region
        $region13: #{tpu_custom_call.1} parent=11 // pred_check
          %p157 = pneg %p72
        $region14: #{tpu_custom_call.1} parent=11 // pred_check_branch
          %159 = sbr.rel (%p157) target = $region16
        $region15: #{tpu_custom_call.1} parent=11 // pred_region
          _
        $region16: #{tpu_custom_call.1} parent=11 // pred_fallthru
          _
        // Predicated region
        $region17: #{tpu_custom_call.1} parent=11 // pred_check
          %p160 = pneg %p93
        $region18: #{tpu_custom_call.1} parent=11 // pred_check_branch
          %162 = sbr.rel (%p160) target = $region20
        $region19: #{tpu_custom_call.1} parent=11 // pred_region
          _
        $region20: #{tpu_custom_call.1} parent=11 // pred_fallthru
          _
        // Predicated region
        $region21: #{tpu_custom_call.1} parent=11 // pred_check
          %p163 = pneg %p114
        $region22: #{tpu_custom_call.1} parent=11 // pred_check_branch
          %165 = sbr.rel (%p163) target = $region24
        $region23: #{tpu_custom_call.1} parent=11 // pred_region
          _
        $region24: #{tpu_custom_call.1} parent=11 // pred_fallthru
          _
      $region12: #{tpu_custom_call.1} parent=5 // pred_fallthru
        _
      %p166 = scmp.lt.s32.totalorder %s13, 2
      // Predicated region
      $region25: #{tpu_custom_call.1} parent=5 // pred_check
        %p167 = pneg %p166
      $region26: #{tpu_custom_call.1} parent=5 // pred_check_branch
        %169 = sbr.rel (%p167) target = $region28
      $region27: #{tpu_custom_call.1} parent=5 // pred_region
        // Predicated region
        $region29: #{tpu_custom_call.1} parent=27 // pred_check
          %p170 = pneg %p45
        $region30: #{tpu_custom_call.1} parent=27 // pred_check_branch
          %172 = sbr.rel (%p170) target = $region32
        $region31: #{tpu_custom_call.1} parent=27 // pred_region
          %s173 = sand.u32 %s35, 1
          %s174 = scalar_lea.sflag [#allocation3], %s173
          %s175 = sand.u32 %s35, 1
          %s176 = smul.addr %s175, 128
          %s177 = scalar_lea.vmem [#allocation2], %s176
          %s179 = ssub.s32 2048, 2048
          %180 = vsyncadd %s174, %s179
          %s181 = smul.addr %s20, 32
          %s182 = smul.addr %s181, 64
          %s183 = scalar_lea.hbm %s0, %s182
          %s184 = sshll.u32 %s177, 4
          %s185 = int_to_ptr.vmem [resolvable:$true] %s184
          %190 = dma.hbm_to_vmem [thread:$0]  %s183, 2048, %s185, %s174, 64, 64, 4
        $region32: #{tpu_custom_call.1} parent=27 // pred_fallthru
          _
      $region28: #{tpu_custom_call.1} parent=5 // pred_fallthru
        _
      %p191 = scmp.le.s32.totalorder 1, %s13
      %p192 = scmp.lt.s32.totalorder %s13, 3
      %p193 = pnand %p191, %p192
      %p194 = pneg %p193
      // Predicated region
      $region33: #{tpu_custom_call.1} parent=5 // pred_check
        _
      $region34: #{tpu_custom_call.1} parent=5 // pred_check_branch
        %196 = sbr.rel (%p193) target = $region36
      $region35: #{tpu_custom_call.1} parent=5 // pred_region
        %s197 = ssub.s32 %s13, 1
        %s198 = sand.u32 %s38, 1
        %s199 = scalar_lea.sflag [#allocation3], %s198
        %s200 = sand.u32 %s38, 1
        %s201 = smul.addr %s200, 128
        %s202 = scalar_lea.vmem [#allocation2], %s201
        // Predicated region
        $region37: #{tpu_custom_call.1} parent=35 // pred_check
          %p203 = pneg %p51
        $region38: #{tpu_custom_call.1} parent=35 // pred_check_branch
          %205 = sbr.rel (%p203) target = $region40
        $region39: #{tpu_custom_call.1} parent=35 // pred_region
          %206 = dma.done %s199, 2048
        $region40: #{tpu_custom_call.1} parent=35 // pred_fallthru
          _
        %s207 = sand.u32 %s38, 1
        %s208 = scalar_lea.sflag [#allocation3], %s207
        %s209 = sand.u32 %s38, 1
        %s210 = smul.addr %s209, 128
        %s211 = scalar_lea.vmem [#allocation2], %s210
        %p212 = pneg %p51
        %p213 = pneg %p48
        %p214 = pneg %p72
        %p215 = pneg %p69
        %p216 = pneg %p93
        %p217 = pneg %p90
        %p218 = pneg %p114
        %p219 = pneg %p111
        %p220 = pneg %p142
        %p221 = pneg %p139
        %s222 = smul.u32 32, %s23
        %p223 = scmp.lt.s32.totalorder %s22, 1
        %s224 = scalar_select %p223, %s22, 1
        %p225 = scmp.lt.s32.totalorder %s222, 31
        %s226 = scalar_select %p225, %s222, 31
        %s227 = smul.addr %s224, 32
        %s228 = sadd.s32 %s226, %s227
        %s229 = smul.addr %s228, 4
        %s230 = scalar_lea.vmem %s4, %s229
        %s231 = smul.u32 32, %s23
        %p232 = scmp.lt.s32.totalorder %s22, 1
        %s233 = scalar_select %p232, %s22, 1
        %p234 = scmp.lt.s32.totalorder %s231, 31
        %s235 = scalar_select %p234, %s231, 31
        %s236 = smul.addr %s233, 32
        %s237 = sadd.s32 %s235, %s236
        %s238 = smul.addr %s237, 4
        %s239 = scalar_lea.vmem %s4, %s238
        %s240 = smul.u32 32, %s23
        %s242 = smul.u32 %s23, 16
        %s243 = smul.u32 %s242, 2
        %s244 = smul.addr %s243, 4
        %s245 = scalar_lea.vmem %s202, %s244 [#allocation2]
        %v246 = vld [vmem:[%s245] sm:$0xf]
        %v247 = vld [vmem:[%s245 + $0x4] sm:$0xf]
        %v248 = vld [vmem:[%s245 + $0x8] sm:$0xf]
        %v249 = vld [vmem:[%s245 + $0xc] sm:$0xf]
        %v250 = vld [vmem:[%s245 + $0x10] sm:$0xf]
        %v251 = vld [vmem:[%s245 + $0x14] sm:$0xf]
        %v252 = vld [vmem:[%s245 + $0x18] sm:$0xf]
        %v253 = vld [vmem:[%s245 + $0x1c] sm:$0xf]
        %v254 = vld [vmem:[%s245 + $0x20] sm:$0xf]
        %v255 = vld [vmem:[%s245 + $0x24] sm:$0xf]
        %v256 = vld [vmem:[%s245 + $0x28] sm:$0xf]
        %v257 = vld [vmem:[%s245 + $0x2c] sm:$0xf]
        %v258 = vld [vmem:[%s245 + $0x30] sm:$0xf]
        %v259 = vld [vmem:[%s245 + $0x34] sm:$0xf]
        %v260 = vld [vmem:[%s245 + $0x38] sm:$0xf]
        %v261 = vld [vmem:[%s245 + $0x3c] sm:$0xf]
        %v262 = vld [vmem:[%s245 + $0x40] sm:$0xf]
        %v263 = vld [vmem:[%s245 + $0x44] sm:$0xf]
        %v264 = vld [vmem:[%s245 + $0x48] sm:$0xf]
        %v265 = vld [vmem:[%s245 + $0x4c] sm:$0xf]
        %v266 = vld [vmem:[%s245 + $0x50] sm:$0xf]
        %v267 = vld [vmem:[%s245 + $0x54] sm:$0xf]
        %v268 = vld [vmem:[%s245 + $0x58] sm:$0xf]
        %v269 = vld [vmem:[%s245 + $0x5c] sm:$0xf]
        %v270 = vld [vmem:[%s245 + $0x60] sm:$0xf]
        %v271 = vld [vmem:[%s245 + $0x64] sm:$0xf]
        %v272 = vld [vmem:[%s245 + $0x68] sm:$0xf]
        %v273 = vld [vmem:[%s245 + $0x6c] sm:$0xf]
        %v274 = vld [vmem:[%s245 + $0x70] sm:$0xf]
        %v275 = vld [vmem:[%s245 + $0x74] sm:$0xf]
        %v276 = vld [vmem:[%s245 + $0x78] sm:$0xf]
        %v277 = vld [vmem:[%s245 + $0x7c] sm:$0xf]
        %v278 = vld [vmem:[%s1] sm:$0xf]
        %v279 = vld [vmem:[%s1 + $0x4] sm:$0xf]
        %v280 = vld [vmem:[%s1 + $0x8] sm:$0xf]
        %v281 = vld [vmem:[%s1 + $0xc] sm:$0xf]
        %v282 = vld [vmem:[%s1 + $0x10] sm:$0xf]
        %v283 = vld [vmem:[%s1 + $0x14] sm:$0xf]
        %v284 = vld [vmem:[%s1 + $0x18] sm:$0xf]
        %v285 = vld [vmem:[%s1 + $0x1c] sm:$0xf]
        %v318 = vunpack.c.l.b16 %v246
        %v319 = vunpack.c.l.b16 %v247
        %v320 = vunpack.c.l.b16 %v248
        %v321 = vunpack.c.l.b16 %v249
        %v322 = vunpack.c.l.b16 %v250
        %v323 = vunpack.c.l.b16 %v251
        %v324 = vunpack.c.l.b16 %v252
        %v325 = vunpack.c.l.b16 %v253
        %v326 = vunpack.c.l.b16 %v254
        %v327 = vunpack.c.l.b16 %v255
        %v328 = vunpack.c.l.b16 %v256
        %v329 = vunpack.c.l.b16 %v257
        %v330 = vunpack.c.l.b16 %v258
        %v331 = vunpack.c.l.b16 %v259
        %v332 = vunpack.c.l.b16 %v260
        %v333 = vunpack.c.l.b16 %v261
        %v334 = vunpack.c.l.b16 %v262
        %v335 = vunpack.c.l.b16 %v263
        %v336 = vunpack.c.l.b16 %v264
        %v337 = vunpack.c.l.b16 %v265
        %v338 = vunpack.c.l.b16 %v266
        %v339 = vunpack.c.l.b16 %v267
        %v340 = vunpack.c.l.b16 %v268
        %v341 = vunpack.c.l.b16 %v269
        %v342 = vunpack.c.l.b16 %v270
        %v343 = vunpack.c.l.b16 %v271
        %v344 = vunpack.c.l.b16 %v272
        %v345 = vunpack.c.l.b16 %v273
        %v346 = vunpack.c.l.b16 %v274
        %v347 = vunpack.c.l.b16 %v275
        %v348 = vunpack.c.l.b16 %v276
        %v349 = vunpack.c.l.b16 %v277
        %v350 = vpack.c.b16 %v319, %v318
        %v351 = vpack.c.b16 %v321, %v320
        %v352 = vpack.c.b16 %v323, %v322
        %v353 = vpack.c.b16 %v325, %v324
        %v354 = vpack.c.b16 %v327, %v326
        %v355 = vpack.c.b16 %v329, %v328
        %v356 = vpack.c.b16 %v331, %v330
        %v357 = vpack.c.b16 %v333, %v332
        %v358 = vpack.c.b16 %v335, %v334
        %v359 = vpack.c.b16 %v337, %v336
        %v360 = vpack.c.b16 %v339, %v338
        %v361 = vpack.c.b16 %v341, %v340
        %v362 = vpack.c.b16 %v343, %v342
        %v363 = vpack.c.b16 %v345, %v344
        %v364 = vpack.c.b16 %v347, %v346
        %v365 = vpack.c.b16 %v349, %v348
        %v374 = vunpack.c.l.b16 %v278
        %v375 = vunpack.c.l.b16 %v279
        %v376 = vunpack.c.l.b16 %v280
        %v377 = vunpack.c.l.b16 %v281
        %v378 = vunpack.c.l.b16 %v282
        %v379 = vunpack.c.l.b16 %v283
        %v380 = vunpack.c.l.b16 %v284
        %v381 = vunpack.c.l.b16 %v285
        %v382 = vpack.c.b16 %v375, %v374
        %v383 = vpack.c.b16 %v377, %v376
        %v384 = vpack.c.b16 %v379, %v378
        %v385 = vpack.c.b16 %v381, %v380
        %vm390 = vcmask 523264
        %v392 = vsel %vm390, %v350, 0
        %v395 = vsel %vm390, %v351, 0
        %v398 = vsel %vm390, %v352, 0
        %v401 = vsel %vm390, %v353, 0
        %v404 = vsel %vm390, %v354, 0
        %v407 = vsel %vm390, %v355, 0
        %v410 = vsel %vm390, %v356, 0
        %v413 = vsel %vm390, %v357, 0
        %v416 = vsel %vm390, %v358, 0
        %v419 = vsel %vm390, %v359, 0
        %v422 = vsel %vm390, %v360, 0
        %v425 = vsel %vm390, %v361, 0
        %v428 = vsel %vm390, %v362, 0
        %v431 = vsel %vm390, %v363, 0
        %v434 = vsel %vm390, %v364, 0
        %v437 = vsel %vm390, %v365, 0
        %439 = vmatprep.subr.bf16.mxu0 0
        %440 = vmatpush1.bf16.msra.mxu0 %v382
        %441 = vmatprep.subr.bf16.mxu0 0
        %442 = vmatpush1.bf16.msra.mxu0 %v383
        %443 = vmatprep.subr.bf16.mxu0 0
        %444 = vmatpush1.bf16.msra.mxu0 %v384
        %445 = vmatprep.subr.bf16.mxu0 0
        %446 = vmatpush1.bf16.msra.mxu0 %v385
        %447 = vmatprep.subr.bf16.mxu0 0
        %448 = vmatpush1.bf16.msra.mxu0 0
        %449 = vmatprep.subr.bf16.mxu0 0
        %450 = vmatpush1.bf16.msra.mxu0 0
        %451 = vmatprep.subr.bf16.mxu0 0
        %452 = vmatpush1.bf16.msra.mxu0 0
        %453 = vmatprep.subr.bf16.mxu0 0
        %454 = vmatpush1.bf16.msra.mxu0 0
        %455 = vmatprep.subr.bf16.mxu0 0
        %456 = vmatpush1.bf16.msra.mxu0 0
        %457 = vmatprep.subr.bf16.mxu0 0
        %458 = vmatpush1.bf16.msra.mxu0 0
        %459 = vmatprep.subr.bf16.mxu0 0
        %460 = vmatpush1.bf16.msra.mxu0 0
        %461 = vmatprep.subr.bf16.mxu0 0
        %462 = vmatpush1.bf16.msra.mxu0 0
        %463 = vmatprep.subr.bf16.mxu0 0
        %464 = vmatpush1.bf16.msra.mxu0 0
        %465 = vmatprep.subr.bf16.mxu0 0
        %466 = vmatpush1.bf16.msra.mxu0 0
        %467 = vmatprep.subr.bf16.mxu0 0
        %468 = vmatpush1.bf16.msra.mxu0 0
        %469 = vmatprep.subr.bf16.mxu0 0
        %470 = vmatpush1.bf16.msra.mxu0 0
        %471 = vmatprep.mubr.bf16.mxu0 0
        %472 = vmatmul.mubr.bf16.gmra.mrb[0].mxu0 %v392
        %v473 = vpop.f32.mrb[0].mxu0
        %v474 = vadd.f32 0.0, %v473
        %v475 = vpop.f32.mrb[0].mxu0
        %v476 = vpop.f32.mrb[0].mxu0
        %v477 = vadd.f32 0.0, %v476
        %v478 = vpop.f32.mrb[0].mxu0
        %479 = vmatprep.mubr.bf16.mxu0 0
        %480 = vmatmul.mubr.bf16.gmra.mrb[0].mxu0 %v395
        %v481 = vpop.f32.mrb[0].mxu0
        %v482 = vadd.f32 0.0, %v481
        %v483 = vpop.f32.mrb[0].mxu0
        %v484 = vpop.f32.mrb[0].mxu0
        %v485 = vadd.f32 0.0, %v484
        %v486 = vpop.f32.mrb[0].mxu0
        %487 = vmatprep.mubr.bf16.mxu0 0
        %488 = vmatmul.mubr.bf16.gmra.mrb[0].mxu0 %v398
        %v489 = vpop.f32.mrb[0].mxu0
        %v490 = vadd.f32 0.0, %v489
        %v491 = vpop.f32.mrb[0].mxu0
        %v492 = vpop.f32.mrb[0].mxu0
        %v493 = vadd.f32 0.0, %v492
        %v494 = vpop.f32.mrb[0].mxu0
        %495 = vmatprep.mubr.bf16.mxu0 0
        %496 = vmatmul.mubr.bf16.gmra.mrb[0].mxu0 %v401
        %v497 = vpop.f32.mrb[0].mxu0
        %v498 = vadd.f32 0.0, %v497
        %v499 = vpop.f32.mrb[0].mxu0
        %v500 = vpop.f32.mrb[0].mxu0
        %v501 = vadd.f32 0.0, %v500
        %v502 = vpop.f32.mrb[0].mxu0
        %503 = vmatprep.mubr.bf16.mxu0 0
        %504 = vmatmul.mubr.bf16.gmra.mrb[0].mxu0 %v404
        %v505 = vpop.f32.mrb[0].mxu0
        %v506 = vadd.f32 0.0, %v505
        %v507 = vpop.f32.mrb[0].mxu0
        %v508 = vpop.f32.mrb[0].mxu0
        %v509 = vadd.f32 0.0, %v508
        %v510 = vpop.f32.mrb[0].mxu0
        %511 = vmatprep.mubr.bf16.mxu0 0
        %512 = vmatmul.mubr.bf16.gmra.mrb[0].mxu0 %v407
        %v513 = vpop.f32.mrb[0].mxu0
        %v514 = vadd.f32 0.0, %v513
        %v515 = vpop.f32.mrb[0].mxu0
        %v516 = vpop.f32.mrb[0].mxu0
        %v517 = vadd.f32 0.0, %v516
        %v518 = vpop.f32.mrb[0].mxu0
        %519 = vmatprep.mubr.bf16.mxu0 0
        %520 = vmatmul.mubr.bf16.gmra.mrb[0].mxu0 %v410
        %v521 = vpop.f32.mrb[0].mxu0
        %v522 = vadd.f32 0.0, %v521
        %v523 = vpop.f32.mrb[0].mxu0
        %v524 = vpop.f32.mrb[0].mxu0
        %v525 = vadd.f32 0.0, %v524
        %v526 = vpop.f32.mrb[0].mxu0
        %527 = vmatprep.mubr.bf16.mxu0 0
        %528 = vmatmul.mubr.bf16.gmra.mrb[0].mxu0 %v413
        %v529 = vpop.f32.mrb[0].mxu0
        %v530 = vadd.f32 0.0, %v529
        %v531 = vpop.f32.mrb[0].mxu0
        %v532 = vpop.f32.mrb[0].mxu0
        %v533 = vadd.f32 0.0, %v532
        %v534 = vpop.f32.mrb[0].mxu0
        %535 = vmatprep.mubr.bf16.mxu0 0
        %536 = vmatmul.mubr.bf16.gmra.mrb[0].mxu0 %v416
        %v537 = vpop.f32.mrb[0].mxu0
        %v538 = vadd.f32 0.0, %v537
        %v539 = vpop.f32.mrb[0].mxu0
        %v540 = vpop.f32.mrb[0].mxu0
        %v541 = vadd.f32 0.0, %v540
        %v542 = vpop.f32.mrb[0].mxu0
        %543 = vmatprep.mubr.bf16.mxu0 0
        %544 = vmatmul.mubr.bf16.gmra.mrb[0].mxu0 %v419
        %v545 = vpop.f32.mrb[0].mxu0
        %v546 = vadd.f32 0.0, %v545
        %v547 = vpop.f32.mrb[0].mxu0
        %v548 = vpop.f32.mrb[0].mxu0
        %v549 = vadd.f32 0.0, %v548
        %v550 = vpop.f32.mrb[0].mxu0
        %551 = vmatprep.mubr.bf16.mxu0 0
        %552 = vmatmul.mubr.bf16.gmra.mrb[0].mxu0 %v422
        %v553 = vpop.f32.mrb[0].mxu0
        %v554 = vadd.f32 0.0, %v553
        %v555 = vpop.f32.mrb[0].mxu0
        %v556 = vpop.f32.mrb[0].mxu0
        %v557 = vadd.f32 0.0, %v556
        %v558 = vpop.f32.mrb[0].mxu0
        %559 = vmatprep.mubr.bf16.mxu0 0
        %560 = vmatmul.mubr.bf16.gmra.mrb[0].mxu0 %v425
        %v561 = vpop.f32.mrb[0].mxu0
        %v562 = vadd.f32 0.0, %v561
        %v563 = vpop.f32.mrb[0].mxu0
        %v564 = vpop.f32.mrb[0].mxu0
        %v565 = vadd.f32 0.0, %v564
        %v566 = vpop.f32.mrb[0].mxu0
        %567 = vmatprep.mubr.bf16.mxu0 0
        %568 = vmatmul.mubr.bf16.gmra.mrb[0].mxu0 %v428
        %v569 = vpop.f32.mrb[0].mxu0
        %v570 = vadd.f32 0.0, %v569
        %v571 = vpop.f32.mrb[0].mxu0
        %v572 = vpop.f32.mrb[0].mxu0
        %v573 = vadd.f32 0.0, %v572
        %v574 = vpop.f32.mrb[0].mxu0
        %575 = vmatprep.mubr.bf16.mxu0 0
        %576 = vmatmul.mubr.bf16.gmra.mrb[0].mxu0 %v431
        %v577 = vpop.f32.mrb[0].mxu0
        %v578 = vadd.f32 0.0, %v577
        %v579 = vpop.f32.mrb[0].mxu0
        %v580 = vpop.f32.mrb[0].mxu0
        %v581 = vadd.f32 0.0, %v580
        %v582 = vpop.f32.mrb[0].mxu0
        %583 = vmatprep.mubr.bf16.mxu0 0
        %584 = vmatmul.mubr.bf16.gmra.mrb[0].mxu0 %v434
        %v585 = vpop.f32.mrb[0].mxu0
        %v586 = vadd.f32 0.0, %v585
        %v587 = vpop.f32.mrb[0].mxu0
        %v588 = vpop.f32.mrb[0].mxu0
        %v589 = vadd.f32 0.0, %v588
        %v590 = vpop.f32.mrb[0].mxu0
        %591 = vmatprep.mubr.bf16.mxu0 0
        %592 = vmatmul.mubr.bf16.gmra.mrb[0].mxu0 %v437
        %v593 = vpop.f32.mrb[0].mxu0
        %v594 = vadd.f32 0.0, %v593
        %v595 = vpop.f32.mrb[0].mxu0
        %v596 = vpop.f32.mrb[0].mxu0
        %v597 = vadd.f32 0.0, %v596
        %v598 = vpop.f32.mrb[0].mxu0
        %599 = vdwg.mxu0
        %v600 = vld [vmem:[%s2] sm:$0x1]
        %v602 = vlaneseq
        %v603 = vshrl.u32 %v602, 7
        %v604 = vsub.s32 0, %v603
        %v605 = vrot.slane %v600, %v604
        %v607 = vmul.f32 %v474, %v605
        %v608 = vmul.f32 %v477, %v605
        %v609 = vmul.f32 %v482, %v605
        %v610 = vmul.f32 %v485, %v605
        %v611 = vmul.f32 %v490, %v605
        %v612 = vmul.f32 %v493, %v605
        %v613 = vmul.f32 %v498, %v605
        %v614 = vmul.f32 %v501, %v605
        %v615 = vmul.f32 %v506, %v605
        %v616 = vmul.f32 %v509, %v605
        %v617 = vmul.f32 %v514, %v605
        %v618 = vmul.f32 %v517, %v605
        %v619 = vmul.f32 %v522, %v605
        %v620 = vmul.f32 %v525, %v605
        %v621 = vmul.f32 %v530, %v605
        %v622 = vmul.f32 %v533, %v605
        %v623 = vmul.f32 %v538, %v605
        %v624 = vmul.f32 %v541, %v605
        %v625 = vmul.f32 %v546, %v605
        %v626 = vmul.f32 %v549, %v605
        %v627 = vmul.f32 %v554, %v605
        %v628 = vmul.f32 %v557, %v605
        %v629 = vmul.f32 %v562, %v605
        %v630 = vmul.f32 %v565, %v605
        %v631 = vmul.f32 %v570, %v605
        %v632 = vmul.f32 %v573, %v605
        %v633 = vmul.f32 %v578, %v605
        %v634 = vmul.f32 %v581, %v605
        %v635 = vmul.f32 %v586, %v605
        %v636 = vmul.f32 %v589, %v605
        %v637 = vmul.f32 %v594, %v605
        %v638 = vmul.f32 %v597, %v605
        %v639 = vld [vmem:[%s3] sm:$0x1]
        %v641 = vlaneseq
        %v642 = vshrl.u32 %v641, 7
        %v643 = vsub.s32 0, %v642
        %v644 = vrot.slane %v639, %v643
        %v646 = vadd.f32 %v607, %v644
        %v647 = vadd.f32 %v608, %v644
        %v648 = vadd.f32 %v609, %v644
        %v649 = vadd.f32 %v610, %v644
        %v650 = vadd.f32 %v611, %v644
        %v651 = vadd.f32 %v612, %v644
        %v652 = vadd.f32 %v613, %v644
        %v653 = vadd.f32 %v614, %v644
        %v654 = vadd.f32 %v615, %v644
        %v655 = vadd.f32 %v616, %v644
        %v656 = vadd.f32 %v617, %v644
        %v657 = vadd.f32 %v618, %v644
        %v658 = vadd.f32 %v619, %v644
        %v659 = vadd.f32 %v620, %v644
        %v660 = vadd.f32 %v621, %v644
        %v661 = vadd.f32 %v622, %v644
        %v662 = vadd.f32 %v623, %v644
        %v663 = vadd.f32 %v624, %v644
        %v664 = vadd.f32 %v625, %v644
        %v665 = vadd.f32 %v626, %v644
        %v666 = vadd.f32 %v627, %v644
        %v667 = vadd.f32 %v628, %v644
        %v668 = vadd.f32 %v629, %v644
        %v669 = vadd.f32 %v630, %v644
        %v670 = vadd.f32 %v631, %v644
        %v671 = vadd.f32 %v632, %v644
        %v672 = vadd.f32 %v633, %v644
        %v673 = vadd.f32 %v634, %v644
        %v674 = vadd.f32 %v635, %v644
        %v675 = vadd.f32 %v636, %v644
        %v676 = vadd.f32 %v637, %v644
        %v677 = vadd.f32 %v638, %v644
        %vm678 = vcmp.ge.f32.partialorder %v646, 0.0
        %vm679 = vcmp.ge.f32.partialorder %v647, 0.0
        %vm680 = vcmp.ge.f32.partialorder %v648, 0.0
        %vm681 = vcmp.ge.f32.partialorder %v649, 0.0
        %vm682 = vcmp.ge.f32.partialorder %v650, 0.0
        %vm683 = vcmp.ge.f32.partialorder %v651, 0.0
        %vm684 = vcmp.ge.f32.partialorder %v652, 0.0
        %vm685 = vcmp.ge.f32.partialorder %v653, 0.0
        %vm686 = vcmp.ge.f32.partialorder %v654, 0.0
        %vm687 = vcmp.ge.f32.partialorder %v655, 0.0
        %vm688 = vcmp.ge.f32.partialorder %v656, 0.0
        %vm689 = vcmp.ge.f32.partialorder %v657, 0.0
        %vm690 = vcmp.ge.f32.partialorder %v658, 0.0
        %vm691 = vcmp.ge.f32.partialorder %v659, 0.0
        %vm692 = vcmp.ge.f32.partialorder %v660, 0.0
        %vm693 = vcmp.ge.f32.partialorder %v661, 0.0
        %vm694 = vcmp.ge.f32.partialorder %v662, 0.0
        %vm695 = vcmp.ge.f32.partialorder %v663, 0.0
        %vm696 = vcmp.ge.f32.partialorder %v664, 0.0
        %vm697 = vcmp.ge.f32.partialorder %v665, 0.0
        %vm698 = vcmp.ge.f32.partialorder %v666, 0.0
        %vm699 = vcmp.ge.f32.partialorder %v667, 0.0
        %vm700 = vcmp.ge.f32.partialorder %v668, 0.0
        %vm701 = vcmp.ge.f32.partialorder %v669, 0.0
        %vm702 = vcmp.ge.f32.partialorder %v670, 0.0
        %vm703 = vcmp.ge.f32.partialorder %v671, 0.0
        %vm704 = vcmp.ge.f32.partialorder %v672, 0.0
        %vm705 = vcmp.ge.f32.partialorder %v673, 0.0
        %vm706 = vcmp.ge.f32.partialorder %v674, 0.0
        %vm707 = vcmp.ge.f32.partialorder %v675, 0.0
        %vm708 = vcmp.ge.f32.partialorder %v676, 0.0
        %vm709 = vcmp.ge.f32.partialorder %v677, 0.0
        %v710 = vmul.f32 %v646, 0.2
        %v711 = vmul.f32 %v647, 0.2
        %v712 = vmul.f32 %v648, 0.2
        %v713 = vmul.f32 %v649, 0.2
        %v714 = vmul.f32 %v650, 0.2
        %v715 = vmul.f32 %v651, 0.2
        %v716 = vmul.f32 %v652, 0.2
        %v717 = vmul.f32 %v653, 0.2
        %v718 = vmul.f32 %v654, 0.2
        %v719 = vmul.f32 %v655, 0.2
        %v720 = vmul.f32 %v656, 0.2
        %v721 = vmul.f32 %v657, 0.2
        %v722 = vmul.f32 %v658, 0.2
        %v723 = vmul.f32 %v659, 0.2
        %v724 = vmul.f32 %v660, 0.2
        %v725 = vmul.f32 %v661, 0.2
        %v726 = vmul.f32 %v662, 0.2
        %v727 = vmul.f32 %v663, 0.2
        %v728 = vmul.f32 %v664, 0.2
        %v729 = vmul.f32 %v665, 0.2
        %v730 = vmul.f32 %v666, 0.2
        %v731 = vmul.f32 %v667, 0.2
        %v732 = vmul.f32 %v668, 0.2
        %v733 = vmul.f32 %v669, 0.2
        %v734 = vmul.f32 %v670, 0.2
        %v735 = vmul.f32 %v671, 0.2
        %v736 = vmul.f32 %v672, 0.2
        %v737 = vmul.f32 %v673, 0.2
        %v738 = vmul.f32 %v674, 0.2
        %v739 = vmul.f32 %v675, 0.2
        %v740 = vmul.f32 %v676, 0.2
        %v741 = vmul.f32 %v677, 0.2
        %v742 = vsel %vm678, %v646, %v710
        %v743 = vsel %vm679, %v647, %v711
        %v744 = vsel %vm680, %v648, %v712
        %v745 = vsel %vm681, %v649, %v713
        %v746 = vsel %vm682, %v650, %v714
        %v747 = vsel %vm683, %v651, %v715
        %v748 = vsel %vm684, %v652, %v716
        %v749 = vsel %vm685, %v653, %v717
        %v750 = vsel %vm686, %v654, %v718
        %v751 = vsel %vm687, %v655, %v719
        %v752 = vsel %vm688, %v656, %v720
        %v753 = vsel %vm689, %v657, %v721
        %v754 = vsel %vm690, %v658, %v722
        %v755 = vsel %vm691, %v659, %v723
        %v756 = vsel %vm692, %v660, %v724
        %v757 = vsel %vm693, %v661, %v725
        %v758 = vsel %vm694, %v662, %v726
        %v759 = vsel %vm695, %v663, %v727
        %v760 = vsel %vm696, %v664, %v728
        %v761 = vsel %vm697, %v665, %v729
        %v762 = vsel %vm698, %v666, %v730
        %v763 = vsel %vm699, %v667, %v731
        %v764 = vsel %vm700, %v668, %v732
        %v765 = vsel %vm701, %v669, %v733
        %v766 = vsel %vm702, %v670, %v734
        %v767 = vsel %vm703, %v671, %v735
        %v768 = vsel %vm704, %v672, %v736
        %v769 = vsel %vm705, %v673, %v737
        %v770 = vsel %vm706, %v674, %v738
        %v771 = vsel %vm707, %v675, %v739
        %v772 = vsel %vm708, %v676, %v740
        %v773 = vsel %vm709, %v677, %v741
        %v774 = vpack.c.bf16 %v743, %v742
        %v775 = vpack.c.bf16 %v745, %v744
        %v776 = vpack.c.bf16 %v747, %v746
        %v777 = vpack.c.bf16 %v749, %v748
        %v778 = vpack.c.bf16 %v751, %v750
        %v779 = vpack.c.bf16 %v753, %v752
        %v780 = vpack.c.bf16 %v755, %v754
        %v781 = vpack.c.bf16 %v757, %v756
        %v782 = vpack.c.bf16 %v759, %v758
        %v783 = vpack.c.bf16 %v761, %v760
        %v784 = vpack.c.bf16 %v763, %v762
        %v785 = vpack.c.bf16 %v765, %v764
        %v786 = vpack.c.bf16 %v767, %v766
        %v787 = vpack.c.bf16 %v769, %v768
        %v788 = vpack.c.bf16 %v771, %v770
        %v789 = vpack.c.bf16 %v773, %v772
        %v806 = vunpack.c.l.b16 %v774
        %v807 = vunpack.c.h.b16 %v774
        %v808 = vunpack.c.l.b16 %v775
        %v809 = vunpack.c.h.b16 %v775
        %v810 = vunpack.c.l.b16 %v776
        %v811 = vunpack.c.h.b16 %v776
        %v812 = vunpack.c.l.b16 %v777
        %v813 = vunpack.c.h.b16 %v777
        %v814 = vunpack.c.l.b16 %v778
        %v815 = vunpack.c.h.b16 %v778
        %v816 = vunpack.c.l.b16 %v779
        %v817 = vunpack.c.h.b16 %v779
        %v818 = vunpack.c.l.b16 %v780
        %v819 = vunpack.c.h.b16 %v780
        %v820 = vunpack.c.l.b16 %v781
        %v821 = vunpack.c.h.b16 %v781
        %v822 = vunpack.c.l.b16 %v782
        %v823 = vunpack.c.h.b16 %v782
        %v824 = vunpack.c.l.b16 %v783
        %v825 = vunpack.c.h.b16 %v783
        %v826 = vunpack.c.l.b16 %v784
        %v827 = vunpack.c.h.b16 %v784
        %v828 = vunpack.c.l.b16 %v785
        %v829 = vunpack.c.h.b16 %v785
        %v830 = vunpack.c.l.b16 %v786
        %v831 = vunpack.c.h.b16 %v786
        %v832 = vunpack.c.l.b16 %v787
        %v833 = vunpack.c.h.b16 %v787
        %v834 = vunpack.c.l.b16 %v788
        %v835 = vunpack.c.h.b16 %v788
        %v836 = vunpack.c.l.b16 %v789
        %v837 = vunpack.c.h.b16 %v789
        %v838 = vpack.c.b16 %v806, %v806
        %v839 = vpack.c.b16 %v807, %v807
        %v840 = vpack.c.b16 %v808, %v808
        %v841 = vpack.c.b16 %v809, %v809
        %v842 = vpack.c.b16 %v810, %v810
        %v843 = vpack.c.b16 %v811, %v811
        %v844 = vpack.c.b16 %v812, %v812
        %v845 = vpack.c.b16 %v813, %v813
        %v846 = vpack.c.b16 %v814, %v814
        %v847 = vpack.c.b16 %v815, %v815
        %v848 = vpack.c.b16 %v816, %v816
        %v849 = vpack.c.b16 %v817, %v817
        %v850 = vpack.c.b16 %v818, %v818
        %v851 = vpack.c.b16 %v819, %v819
        %v852 = vpack.c.b16 %v820, %v820
        %v853 = vpack.c.b16 %v821, %v821
        %v854 = vpack.c.b16 %v822, %v822
        %v855 = vpack.c.b16 %v823, %v823
        %v856 = vpack.c.b16 %v824, %v824
        %v857 = vpack.c.b16 %v825, %v825
        %v858 = vpack.c.b16 %v826, %v826
        %v859 = vpack.c.b16 %v827, %v827
        %v860 = vpack.c.b16 %v828, %v828
        %v861 = vpack.c.b16 %v829, %v829
        %v862 = vpack.c.b16 %v830, %v830
        %v863 = vpack.c.b16 %v831, %v831
        %v864 = vpack.c.b16 %v832, %v832
        %v865 = vpack.c.b16 %v833, %v833
        %v866 = vpack.c.b16 %v834, %v834
        %v867 = vpack.c.b16 %v835, %v835
        %v868 = vpack.c.b16 %v836, %v836
        %v869 = vpack.c.b16 %v837, %v837
        %vm902 = vcmask 125952
        %903 = vst.msk [vmem:[%s239] sm:$0xf] %vm902, %v838
        %904 = vst.msk [vmem:[%s239 + $0x4] sm:$0xf] %vm902, %v839
        %905 = vst.msk [vmem:[%s239 + $0x8] sm:$0xf] %vm902, %v840
        %906 = vst.msk [vmem:[%s239 + $0xc] sm:$0xf] %vm902, %v841
        %907 = vst.msk [vmem:[%s239 + $0x10] sm:$0xf] %vm902, %v842
        %908 = vst.msk [vmem:[%s239 + $0x14] sm:$0xf] %vm902, %v843
        %909 = vst.msk [vmem:[%s239 + $0x18] sm:$0xf] %vm902, %v844
        %910 = vst.msk [vmem:[%s239 + $0x1c] sm:$0xf] %vm902, %v845
        %911 = vst.msk [vmem:[%s239 + $0x20] sm:$0xf] %vm902, %v846
        %912 = vst.msk [vmem:[%s239 + $0x24] sm:$0xf] %vm902, %v847
        %913 = vst.msk [vmem:[%s239 + $0x28] sm:$0xf] %vm902, %v848
        %914 = vst.msk [vmem:[%s239 + $0x2c] sm:$0xf] %vm902, %v849
        %915 = vst.msk [vmem:[%s239 + $0x30] sm:$0xf] %vm902, %v850
        %916 = vst.msk [vmem:[%s239 + $0x34] sm:$0xf] %vm902, %v851
        %917 = vst.msk [vmem:[%s239 + $0x38] sm:$0xf] %vm902, %v852
        %918 = vst.msk [vmem:[%s239 + $0x3c] sm:$0xf] %vm902, %v853
        %919 = vst.msk [vmem:[%s239 + $0x40] sm:$0xf] %vm902, %v854
        %920 = vst.msk [vmem:[%s239 + $0x44] sm:$0xf] %vm902, %v855
        %921 = vst.msk [vmem:[%s239 + $0x48] sm:$0xf] %vm902, %v856
        %922 = vst.msk [vmem:[%s239 + $0x4c] sm:$0xf] %vm902, %v857
        %923 = vst.msk [vmem:[%s239 + $0x50] sm:$0xf] %vm902, %v858
        %924 = vst.msk [vmem:[%s239 + $0x54] sm:$0xf] %vm902, %v859
        %925 = vst.msk [vmem:[%s239 + $0x58] sm:$0xf] %vm902, %v860
        %926 = vst.msk [vmem:[%s239 + $0x5c] sm:$0xf] %vm902, %v861
        %927 = vst.msk [vmem:[%s239 + $0x60] sm:$0xf] %vm902, %v862
        %928 = vst.msk [vmem:[%s239 + $0x64] sm:$0xf] %vm902, %v863
        %929 = vst.msk [vmem:[%s239 + $0x68] sm:$0xf] %vm902, %v864
        %930 = vst.msk [vmem:[%s239 + $0x6c] sm:$0xf] %vm902, %v865
        %931 = vst.msk [vmem:[%s239 + $0x70] sm:$0xf] %vm902, %v866
        %932 = vst.msk [vmem:[%s239 + $0x74] sm:$0xf] %vm902, %v867
        %933 = vst.msk [vmem:[%s239 + $0x78] sm:$0xf] %vm902, %v868
        %934 = vst.msk [vmem:[%s239 + $0x7c] sm:$0xf] %vm902, %v869
        %s935 = smul.u32 32, %s23
        %p936 = scmp.lt.s32.totalorder %s22, 1
        %s937 = scalar_select %p936, %s22, 1
        %p938 = scmp.lt.s32.totalorder %s935, 31
        %s939 = scalar_select %p938, %s935, 31
        %s940 = smul.addr %s937, 32
        %s941 = sadd.s32 %s939, %s940
        %s942 = smul.addr %s941, 4
        %s943 = scalar_lea.vmem %s4, %s942
        // Predicated region
        $region41: #{tpu_custom_call.1} parent=35 // pred_check
          %p944 = pneg %p139
        $region42: #{tpu_custom_call.1} parent=35 // pred_check_branch
          %946 = sbr.rel (%p944) target = $region44
        $region43: #{tpu_custom_call.1} parent=35 // pred_region
          %s947 = smul.u32 32, %s23
        $region44: #{tpu_custom_call.1} parent=35 // pred_fallthru
          _
      $region36: #{tpu_custom_call.1} parent=5 // pred_fallthru
        _
      %p948 = scmp.le.s32.totalorder 2, %s13
      // Predicated region
      $region45: #{tpu_custom_call.1} parent=5 // pred_check
        %p949 = pneg %p948
      $region46: #{tpu_custom_call.1} parent=5 // pred_check_branch
        %951 = sbr.rel (%p949) target = $region48
      $region47: #{tpu_custom_call.1} parent=5 // pred_region
        %s952 = ssub.s32 %s13, 2
        // Predicated region
        $region49: #{tpu_custom_call.1} parent=47 // pred_check
          %p953 = pneg %p145
        $region50: #{tpu_custom_call.1} parent=47 // pred_check_branch
          %955 = sbr.rel (%p953) target = $region52
        $region51: #{tpu_custom_call.1} parent=47 // pred_region
          %s956 = smul.u32 32, %s25
          %p957 = scmp.lt.s32.totalorder %s24, 1
          %s958 = scalar_select %p957, %s24, 1
          %p959 = scmp.lt.s32.totalorder %s956, 31
          %s960 = scalar_select %p959, %s956, 31
          %s961 = smul.addr %s958, 32
          %s962 = sadd.s32 %s960, %s961
          %s963 = smul.addr %s962, 4
          %s964 = scalar_lea.vmem %s4, %s963
        $region52: #{tpu_custom_call.1} parent=47 // pred_fallthru
          _
      $region48: #{tpu_custom_call.1} parent=5 // pred_fallthru
        _
    $region6: #{tpu_custom_call.1} parent=1 // loop_footer
      %s17 = sadd.s32 1, %s13
    $region7: #{tpu_custom_call.1} parent=1 // loop_footer_branch
      %12 = sbr.rel target = $region3
    $region8: #{tpu_custom_call.1} parent=1 // loop_exit
      _
    %965 = vsyncpa [#allocation3], 1
    %s966 = scalar_lea.sflag [#allocation3], 1
    %967 = vsyncpa %s966, 1

</llo_original>
